<compile_context>
chip_gen: v5e
topology: v5e:2x2
jax: 0.10.0
libtpu: 0.0.40
codegen_flags: <defaults>
</compile_context>

<pallas_src>
import math

import jax
import jax.numpy as jnp
from jax.experimental import pallas as pl
from jax.experimental.pallas import tpu as pltpu


def _pair(v):
    return (v, v) if isinstance(v, int) else tuple(v)


def _round_up(v, m):
    return ((v + m - 1) // m) * m


# Per-grid-step VMEM budget for (input block + output block), measured in
# lane/sublane-PADDED bytes.  The pipeline double-buffers both sides, so the
# peak is ~2x this (~12 MiB) plus Mosaic scratch — comfortable under the
# 32 MiB scoped limit requested below on v5e / v6e / v7x.  Raising it on
# v5e/v6e (128 MiB VMEM) buys only a few % (roofline saturates ~1-4 MiB
# blocks), so one conservative constant is used for all generations.
_BLOCK_BYTES_CAP = 6 * 1024 * 1024
_VMEM_LIMIT_BYTES = 32 * 1024 * 1024


def _choose_nc_block(nc, per_nc_bytes, cap_bytes, multiple):
    """Pick the fused-NC block size.

    * Largest block whose padded (in + out) bytes fit `cap_bytes`.
    * Split into >= 2 grid steps when possible (v7x megacore sharding).
    * Even out the steps so the tail block isn't mostly out-of-bounds.
    * Keep the block a multiple of `multiple` (sublane rule for 2-D blocks)
      or equal to the full dim.
    """
    blk_fit = max(1, min(nc, cap_bytes // max(per_nc_bytes, 1)))
    if blk_fit >= nc:
        blk = nc
        if nc >= 2 * multiple:           # split across 2 TCs on v7x; cheap elsewhere
            blk = _round_up(pl.cdiv(nc, 2), multiple)
    else:
        blk = max(multiple, (blk_fit // multiple) * multiple)
        steps = pl.cdiv(nc, blk)
        blk = _round_up(pl.cdiv(nc, steps), multiple)   # even out the tail step
    return min(blk, nc) if blk > nc else blk


def _pad_dim2_only(x, pad_d2_lo, pad_d2_hi):
    """Lane-dense fast path: padding only along dim2 (pad_d3 == 0).

    Fusing (D2, D3) into one trailing axis turns the pad bands into contiguous
    lane ranges at the start/end of each fused row; rows are D2*D3 wide
    (>= 128 lanes for typical feature maps) instead of D3 wide, so stores are
    unmasked and DMA rows are full.  The reshape is free (contiguous array).
    """
    N, C, D2, D3 = x.shape
    OD2 = D2 + pad_d2_lo + pad_d2_hi
    dtype = x.dtype
    isz = jnp.dtype(dtype).itemsize
    sub = max(32 // isz, 8)              # sublane tile: 8 f32, 16 bf16, 32 int8
    NC = N * C

    in_len = D2 * D3
    out_len = OD2 * D3
    lo = pad_d2_lo * D3
    hi = pad_d2_hi * D3

    # Padded-byte accounting per fused row (lane dim padded to 128).
    per_nc = (_round_up(in_len, 128) + _round_up(out_len, 128)) * isz
    nc_blk = _choose_nc_block(NC, per_nc, _BLOCK_BYTES_CAP, sub)

    x2 = x.reshape(NC, in_len)

    def kernel(x_ref, o_ref):
        # Zero only the two pad bands, then one contiguous interior copy.
        if lo:
            o_ref[:, pl.ds(0, lo)] = jnp.zeros((nc_blk, lo), dtype)
        if hi:
            o_ref[:, pl.ds(lo + in_len, hi)] = jnp.zeros((nc_blk, hi), dtype)
        o_ref[:, pl.ds(lo, in_len)] = x_ref[...]

    out2 = pl.pallas_call(
        kernel,
        out_shape=jax.ShapeDtypeStruct((NC, out_len), dtype),
        grid_spec=pltpu.PrefetchScalarGridSpec(
            num_scalar_prefetch=0,
            grid=(pl.cdiv(NC, nc_blk),),
            # Lane dim equals full array dim; sublane block is a multiple of 8
            # (or the full dim) -> (8,128) rule satisfied.
            in_specs=[pl.BlockSpec((nc_blk, in_len), lambda i: (i, 0))],
            out_specs=pl.BlockSpec((nc_blk, out_len), lambda i: (i, 0)),
        ),
        compiler_params=pltpu.CompilerParams(
            dimension_semantics=("parallel",),
            vmem_limit_bytes=_VMEM_LIMIT_BYTES,
        ),
    )(x2)
    return out2.reshape(N, C, OD2, D3)


def _pad_generic(x, pad_d2_lo, pad_d2_hi, pad_d3_lo, pad_d3_hi):
    """General path: padding on dim3 (and possibly dim2)."""
    N, C, D2, D3 = x.shape
    OD2 = D2 + pad_d2_lo + pad_d2_hi
    OD3 = D3 + pad_d3_lo + pad_d3_hi
    dtype = x.dtype
    isz = jnp.dtype(dtype).itemsize
    sub = max(32 // isz, 8)
    NC = N * C

    # VMEM stores tiles in (sub, 128)-padded layout; budget with the REAL
    # footprint so the double-buffered pipeline fits the scoped limit (worst
    # on v7x's 64 MiB physical VMEM, where small D3 inflates bytes up to ~10x).
    per_nc = (_round_up(D2, sub) * _round_up(D3, 128)
              + _round_up(OD2, sub) * _round_up(OD3, 128)) * isz
    nc_blk = _choose_nc_block(NC, per_nc, _BLOCK_BYTES_CAP, 1)
    # TODO(synk): no spatial tiling — assumes one padded (D2,D3)+(OD2,OD3)
    # plane pair fits the per-step VMEM budget (true for typical feature maps).

    x3 = x.reshape(NC, D2, D3)

    def kernel(x_ref, o_ref):
        # Halo-only zeroing: zeros go only to the four pad bands, then the
        # input is copied once into the interior.  All bounds are static ints;
        # every output element is written exactly once.
        if pad_d2_lo:
            o_ref[:, pl.ds(0, pad_d2_lo), :] = jnp.zeros(
                (nc_blk, pad_d2_lo, OD3), dtype)
        if pad_d2_hi:
            o_ref[:, pl.ds(pad_d2_lo + D2, pad_d2_hi), :] = jnp.zeros(
                (nc_blk, pad_d2_hi, OD3), dtype)
        if pad_d3_lo:
            o_ref[:, pl.ds(pad_d2_lo, D2), pl.ds(0, pad_d3_lo)] = jnp.zeros(
                (nc_blk, D2, pad_d3_lo), dtype)
        if pad_d3_hi:
            o_ref[:, pl.ds(pad_d2_lo, D2), pl.ds(pad_d3_lo + D3, pad_d3_hi)] = jnp.zeros(
                (nc_blk, D2, pad_d3_hi), dtype)
        o_ref[:, pl.ds(pad_d2_lo, D2), pl.ds(pad_d3_lo, D3)] = x_ref[...]

    out3 = pl.pallas_call(
        kernel,
        out_shape=jax.ShapeDtypeStruct((NC, OD2, OD3), dtype),
        grid_spec=pltpu.PrefetchScalarGridSpec(
            num_scalar_prefetch=0,
            grid=(pl.cdiv(NC, nc_blk),),
            # Last two block dims equal the full array dims -> (8,128) rule ok.
            in_specs=[pl.BlockSpec((nc_blk, D2, D3), lambda i: (i, 0, 0))],
            out_specs=pl.BlockSpec((nc_blk, OD2, OD3), lambda i: (i, 0, 0)),
        ),
        compiler_params=pltpu.CompilerParams(
            dimension_semantics=("parallel",),
            vmem_limit_bytes=_VMEM_LIMIT_BYTES,
        ),
    )(x3)
    return out3.reshape(N, C, OD2, OD3)


class SamePad2d:
    """Mimics tensorflow's 'SAME' padding (zero constant pad), NCHW layout."""

    def __init__(self, kernel_size, stride):
        self.kernel_size = _pair(kernel_size)
        self.stride = _pair(stride)

    def __call__(self, x):
        # Static padding arithmetic (exactly as in the PyTorch forward).
        in_width = x.shape[2]   # dim2 (module calls this "width")
        in_height = x.shape[3]  # dim3 (module calls this "height")
        out_width = math.ceil(float(in_width) / float(self.stride[0]))
        out_height = math.ceil(float(in_height) / float(self.stride[1]))
        pad_along_width = (out_width - 1) * self.stride[0] + self.kernel_size[0] - in_width
        pad_along_height = (out_height - 1) * self.stride[1] + self.kernel_size[1] - in_height
        pad_left = int(math.floor(pad_along_width / 2))
        pad_top = int(math.floor(pad_along_height / 2))
        pad_right = int(pad_along_width - pad_left)
        pad_bottom = int(pad_along_height - pad_top)

        # F.pad semantics: (pad_left, pad_right) -> dim3 (last dim),
        #                  (pad_top, pad_bottom) -> dim2; negative values crop.
        pad_d2_lo, pad_d2_hi = pad_top, pad_bottom
        pad_d3_lo, pad_d3_hi = pad_left, pad_right

        # Handle F.pad's negative-pad cropping with a static wrapper slice.
        crop_d2_lo, crop_d2_hi = max(-pad_d2_lo, 0), max(-pad_d2_hi, 0)
        crop_d3_lo, crop_d3_hi = max(-pad_d3_lo, 0), max(-pad_d3_hi, 0)
        if crop_d2_lo or crop_d2_hi or crop_d3_lo or crop_d3_hi:
            x = x[:, :,
                  crop_d2_lo:x.shape[2] - crop_d2_hi,
                  crop_d3_lo:x.shape[3] - crop_d3_hi]
        pad_d2_lo, pad_d2_hi = max(pad_d2_lo, 0), max(pad_d2_hi, 0)
        pad_d3_lo, pad_d3_hi = max(pad_d3_lo, 0), max(pad_d3_hi, 0)

        # Nothing to pad -> skip the HBM round trip entirely.
        if pad_d2_lo == pad_d2_hi == pad_d3_lo == pad_d3_hi == 0:
            return x

        # TODO(synk): when the consumer is a conv in the same jit (or the
        # spatial plane is only a few KiB), lax.pad is strictly better: XLA
        # fuses it into the conv and skips this standalone HBM pass.
        if pad_d3_lo == 0 and pad_d3_hi == 0:
            return _pad_dim2_only(x, pad_d2_lo, pad_d2_hi)
        return _pad_generic(x, pad_d2_lo, pad_d2_hi, pad_d3_lo, pad_d3_hi)


if __name__ == "__main__":
    key = jax.random.PRNGKey(0)
    x = jax.random.normal(key, (2, 4, 16, 16), dtype=jnp.float32)

    # kernel_size=3, stride=1 -> symmetric 1-pixel pad on both spatial dims.
    out = jax.block_until_ready(SamePad2d(kernel_size=3, stride=1)(x))
    ref = jnp.pad(x, ((0, 0), (0, 0), (1, 1), (1, 1)))
    assert out.shape == (2, 4, 18, 18), out.shape
    assert bool(jnp.array_equal(out, ref)), "mismatch (k=3, s=1)"

    # kernel_size=3, stride=2 -> asymmetric pad (0 low, 1 high) on each dim.
    out2 = jax.block_until_ready(SamePad2d(kernel_size=3, stride=2)(x))
    ref2 = jnp.pad(x, ((0, 0), (0, 0), (0, 1), (0, 1)))
    assert out2.shape == (2, 4, 17, 17), out2.shape
    assert bool(jnp.array_equal(out2, ref2)), "mismatch (k=3, s=2)"

    # kernel_size=(1,3), stride=1 -> pad only along dim2 -> lane-dense path.
    out3 = jax.block_until_ready(SamePad2d(kernel_size=(1, 3), stride=1)(x))
    ref3 = jnp.pad(x, ((0, 0), (0, 0), (1, 1), (0, 0)))
    assert out3.shape == (2, 4, 18, 16), out3.shape
    assert bool(jnp.array_equal(out3, ref3)), "mismatch (k=(1,3), s=1)"

    # kernel_size=1, stride=2 -> negative pad -> F.pad crops one low element.
    out4 = jax.block_until_ready(SamePad2d(kernel_size=1, stride=2)(x))
    assert out4.shape == (2, 4, 15, 15), out4.shape
    assert bool(jnp.array_equal(out4, x[:, :, 1:, 1:])), "mismatch (crop path)"

    # kernel_size=1, stride=1 -> no padding; kernel launch is skipped.
    out5 = jax.block_until_ready(SamePad2d(kernel_size=1, stride=1)(x))
    assert out5.shape == x.shape and bool(jnp.array_equal(out5, x))

    print("KERNEL_OK")
</pallas_src>

<mosaic_0001>
module attributes {stable_mosaic.version = 11 : i64} {
  func.func @kernel(%arg0: i32, %arg1: memref<4x16x16xf32, #tpu.memory_space<vmem>>, %arg2: memref<4x18x18xf32, #tpu.memory_space<vmem>>) attributes {dimension_semantics = [#tpu.dimension_semantics<parallel>], iteration_bounds = array<i64: 2>, scalar_prefetch = 0 : i64, scratch_operands = 0 : i64, tpu.core_type = #tpu.core_type<tc>, window_params = [{transform_indices = @transform_0, window_bounds = array<i64: 4, 16, 16>}, {transform_indices = @transform_1, window_bounds = array<i64: 4, 18, 18>}]} {
    %cst = arith.constant 0.000000e+00 : f32
    %0 = vector.broadcast %cst : f32 to vector<4x1x18xf32>
    %c0 = arith.constant 0 : index
    %c0_0 = arith.constant 0 : index
    %c0_1 = arith.constant 0 : index
    %1 = vector.load %arg2[%c0, %c0_0, %c0_1] : memref<4x18x18xf32, #tpu.memory_space<vmem>>, vector<4x1x18xf32>
    tpu.vector_store %arg2[%c0, %c0_0, %c0_1], %0 {strides = array<i32>} : memref<4x18x18xf32, #tpu.memory_space<vmem>>, vector<4x1x18xf32>,
    %cst_2 = arith.constant 0.000000e+00 : f32
    %2 = vector.broadcast %cst_2 : f32 to vector<4x1x18xf32>
    %c0_3 = arith.constant 0 : index
    %c17 = arith.constant 17 : index
    %c0_4 = arith.constant 0 : index
    %3 = vector.load %arg2[%c0_3, %c17, %c0_4] : memref<4x18x18xf32, #tpu.memory_space<vmem>>, vector<4x1x18xf32>
    tpu.vector_store %arg2[%c0_3, %c17, %c0_4], %2 {strides = array<i32>} : memref<4x18x18xf32, #tpu.memory_space<vmem>>, vector<4x1x18xf32>,
    %cst_5 = arith.constant 0.000000e+00 : f32
    %4 = vector.broadcast %cst_5 : f32 to vector<4x16x1xf32>
    %c0_6 = arith.constant 0 : index
    %c1 = arith.constant 1 : index
    %c0_7 = arith.constant 0 : index
    %5 = vector.load %arg2[%c0_6, %c1, %c0_7] : memref<4x18x18xf32, #tpu.memory_space<vmem>>, vector<4x16x1xf32>
    tpu.vector_store %arg2[%c0_6, %c1, %c0_7], %4 {strides = array<i32>} : memref<4x18x18xf32, #tpu.memory_space<vmem>>, vector<4x16x1xf32>,
    %cst_8 = arith.constant 0.000000e+00 : f32
    %6 = vector.broadcast %cst_8 : f32 to vector<4x16x1xf32>
    %c0_9 = arith.constant 0 : index
    %c1_10 = arith.constant 1 : index
    %c17_11 = arith.constant 17 : index
    %7 = vector.load %arg2[%c0_9, %c1_10, %c17_11] : memref<4x18x18xf32, #tpu.memory_space<vmem>>, vector<4x16x1xf32>
    tpu.vector_store %arg2[%c0_9, %c1_10, %c17_11], %6 {strides = array<i32>} : memref<4x18x18xf32, #tpu.memory_space<vmem>>, vector<4x16x1xf32>,
    %c0_12 = arith.constant 0 : index
    %c0_13 = arith.constant 0 : index
    %c0_14 = arith.constant 0 : index
    %8 = vector.load %arg1[%c0_12, %c0_13, %c0_14] : memref<4x16x16xf32, #tpu.memory_space<vmem>>, vector<4x16x16xf32>
    %c0_15 = arith.constant 0 : index
    %c1_16 = arith.constant 1 : index
    %c1_17 = arith.constant 1 : index
    %9 = vector.load %arg2[%c0_15, %c1_16, %c1_17] : memref<4x18x18xf32, #tpu.memory_space<vmem>>, vector<4x16x16xf32>
    tpu.vector_store %arg2[%c0_15, %c1_16, %c1_17], %8 {strides = array<i32>} : memref<4x18x18xf32, #tpu.memory_space<vmem>>, vector<4x16x16xf32>,
    return
  }
  func.func @transform_0(%arg0: i32) -> (i32, i32, i32) {
    %c0_i32 = arith.constant 0 : i32
    %c0_i32_0 = arith.constant 0 : i32
    %c0_i32_1 = arith.constant 0 : i32
    return %arg0, %c0_i32, %c0_i32_0 : i32, i32, i32
  }
  func.func @transform_1(%arg0: i32) -> (i32, i32, i32) {
    %c0_i32 = arith.constant 0 : i32
    %c0_i32_0 = arith.constant 0 : i32
    %c0_i32_1 = arith.constant 0 : i32
    return %arg0, %c0_i32, %c0_i32_0 : i32, i32, i32
  }
}

</mosaic_0001>

<llo_original>
// kernel: tpu_custom_call.1
$region0: #{tpu_custom_call.1}
  #allocation0 [shape = 'u32[]', space=smem, size = 0x4, offset = 0x4, fixed_abs, tag = 'smem constant byte address 0x4 - core index']
  #allocation1 [shape = 'u32[72,128]{1,0:T(1,128)}', space=vmem, size = 0x9000, scoped, tag = 'internal scratch']
  %s0 = inlined_call_operand.hbm [shape: f32[8,16,16], index: 0, kind: input, shape index: {}]
  %s1 = inlined_call_operand.vmem [shape: f32[8,18,18], index: 1, kind: output, shape index: {}]
  %s2 = sld [smem:[#allocation0]]
  $region41: #{tpu_custom_call.1} parent=0
    _
  %s4 = ssub.s32 1, %s2
  %s5 = scalar_select 0, %s4, %s2
  $region1: #{tpu_custom_call.1} parent=0
    #allocation2 [shape = 'u8[65536]{0}', space=vmem, size = 0x10000, scoped, tag = 'input window, operand 0']
    #allocation3 [shape = 's32[2]{0}', space=sflag, size = 0x8, scoped, tag = 'scoped memory for tpu_custom_call.1']
    %6 = vsyncpa [#allocation3], 0
    %s7 = scalar_lea.sflag [#allocation3], 1
    %8 = vsyncpa %s7, 0
    loop: start=0, step=1, limit=4
    $region2: #{tpu_custom_call.1} parent=1 // loop_pre_header
      _
    $region3: #{tpu_custom_call.1} parent=1 // loop_header
      %s10 = sphi 0, %s14
      %p11 = scmp.ge.s32.totalorder %s10, 4
      %s20 = sphi 0, %s22
      %s23 = sphi 0, %s20
      %s24 = sphi 0, %s23
      %s40 = sphi 0, %s24
      %s46 = sphi 0, %s48
      %s49 = sphi 0, %s46
      %s50 = sphi 0, %s49
      %s66 = sphi 0, %s50
    $region4: #{tpu_custom_call.1} parent=1 // loop_header_branch
      %13 = sbr.rel (%p11) target = $region8
    $region5: #{tpu_custom_call.1} parent=1 // loop_body
      %s15 = ssub.s32 %s10, 1
      %s16 = ssub.s32 %s10, 2
      %s17 = sadd.s32 %s10, 1
      %s18 = ssub.s32 %s10, %s17
      %p19 = scmp.eq.s32.totalorder %s18, 0
      %s21 = sadd.s32 %s20, 1
      %s22 = scalar_select %p19, %s20, %s21
      %p25 = pneg %p19
      %p26 = scmp.eq.s32.totalorder %s10, 1
      %p27 = por %p25, %p26
      %p28 = scmp.ne.s32.totalorder %s20, %s23
      %p29 = scmp.eq.s32.totalorder %s10, 0
      %p30 = por %p28, %p29
      %p31 = scmp.ne.s32.totalorder %s20, %s23
      %p32 = scmp.eq.s32.totalorder %s15, 1
      %p33 = por %p31, %p32
      %p34 = scmp.ne.s32.totalorder %s23, %s24
      %p35 = scmp.eq.s32.totalorder %s15, 0
      %p36 = por %p34, %p35
      %p37 = scmp.ne.s32.totalorder %s23, %s24
      %p38 = scmp.eq.s32.totalorder %s16, 1
      %p39 = por %p37, %p38
      %p41 = scmp.ne.s32.totalorder %s24, %s40
      %p42 = scmp.eq.s32.totalorder %s16, 0
      %p43 = por %p41, %p42
      %s44 = ssub.s32 %s10, %s17
      %p45 = scmp.eq.s32.totalorder %s44, 0
      %s47 = sadd.s32 %s46, 1
      %s48 = scalar_select %p45, %s46, %s47
      %p51 = pneg %p45
      %p52 = scmp.eq.s32.totalorder %s10, 1
      %p53 = por %p51, %p52
      %p54 = scmp.ne.s32.totalorder %s46, %s49
      %p55 = scmp.eq.s32.totalorder %s10, 0
      %p56 = por %p54, %p55
      %p57 = scmp.ne.s32.totalorder %s46, %s49
      %p58 = scmp.eq.s32.totalorder %s15, 1
      %p59 = por %p57, %p58
      %p60 = scmp.ne.s32.totalorder %s49, %s50
      %p61 = scmp.eq.s32.totalorder %s15, 0
      %p62 = por %p60, %p61
      %p63 = scmp.ne.s32.totalorder %s49, %s50
      %p64 = scmp.eq.s32.totalorder %s16, 1
      %p65 = por %p63, %p64
      %p67 = scmp.ne.s32.totalorder %s50, %s66
      %p68 = scmp.eq.s32.totalorder %s16, 0
      %p69 = por %p67, %p68
      %p70 = scmp.le.s32.totalorder 1, %s10
      %p71 = scmp.lt.s32.totalorder %s10, 3
      %p72 = pnand %p70, %p71
      %p73 = pneg %p72
      // Predicated region
      $region9: #{tpu_custom_call.1} parent=5 // pred_check
        _
      $region10: #{tpu_custom_call.1} parent=5 // pred_check_branch
        %75 = sbr.rel (%p72) target = $region12
      $region11: #{tpu_custom_call.1} parent=5 // pred_region
        %s76 = ssub.s32 %s10, 1
      $region12: #{tpu_custom_call.1} parent=5 // pred_fallthru
        _
      %p77 = scmp.lt.s32.totalorder %s10, 2
      // Predicated region
      $region13: #{tpu_custom_call.1} parent=5 // pred_check
        %p78 = pneg %p77
      $region14: #{tpu_custom_call.1} parent=5 // pred_check_branch
        %80 = sbr.rel (%p78) target = $region16
      $region15: #{tpu_custom_call.1} parent=5 // pred_region
        // Predicated region
        $region17: #{tpu_custom_call.1} parent=15 // pred_check
          %p81 = pneg %p30
        $region18: #{tpu_custom_call.1} parent=15 // pred_check_branch
          %83 = sbr.rel (%p81) target = $region20
        $region19: #{tpu_custom_call.1} parent=15 // pred_region
          %s84 = sand.u32 %s20, 1
          %s85 = scalar_lea.sflag [#allocation3], %s84
          %s86 = sand.u32 %s20, 1
          %s87 = smul.addr %s86, 64
          %s88 = scalar_lea.vmem [#allocation2], %s87
          %s89 = smul.u32 4, %s10
          %91 = vsyncadd %s85, 0
          %s92 = smul.addr %s89, 2
          %s93 = smul.addr %s92, 8
          %s94 = scalar_lea.hbm %s0, %s93
          %s95 = sshll.u32 %s94, 4
          %s96 = int_to_ptr.hbm [resolvable:$true] %s95
          %s97 = sshll.u32 %s88, 4
          %s98 = int_to_ptr.vmem [resolvable:$true] %s97
          %103 = dma.hbm_to_vmem [thread:$0]  %s96, 1024, %s98, %s85, 128, 128, 8
        $region20: #{tpu_custom_call.1} parent=15 // pred_fallthru
          _
      $region16: #{tpu_custom_call.1} parent=5 // pred_fallthru
        _
      %p104 = scmp.le.s32.totalorder 1, %s10
      %p105 = scmp.lt.s32.totalorder %s10, 3
      %p106 = pnand %p104, %p105
      %p107 = pneg %p106
      // Predicated region
      $region21: #{tpu_custom_call.1} parent=5 // pred_check
        _
      $region22: #{tpu_custom_call.1} parent=5 // pred_check_branch
        %109 = sbr.rel (%p106) target = $region24
      $region23: #{tpu_custom_call.1} parent=5 // pred_region
        %s110 = ssub.s32 %s10, 1
        %s111 = sand.u32 %s23, 1
        %s112 = scalar_lea.sflag [#allocation3], %s111
        %s113 = sand.u32 %s23, 1
        %s114 = smul.addr %s113, 64
        %s115 = scalar_lea.vmem [#allocation2], %s114
        // Predicated region
        $region25: #{tpu_custom_call.1} parent=23 // pred_check
          %p116 = pneg %p36
        $region26: #{tpu_custom_call.1} parent=23 // pred_check_branch
          %118 = sbr.rel (%p116) target = $region28
        $region27: #{tpu_custom_call.1} parent=23 // pred_region
          %120 = dma.done %s112, 1024
        $region28: #{tpu_custom_call.1} parent=23 // pred_fallthru
          _
        %s121 = sand.u32 %s23, 1
        %s122 = scalar_lea.sflag [#allocation3], %s121
        %s123 = sand.u32 %s23, 1
        %s124 = smul.addr %s123, 64
        %s125 = scalar_lea.vmem [#allocation2], %s124
        %p126 = pneg %p36
        %p127 = pneg %p33
        %p128 = pneg %p62
        %p129 = pneg %p59
        %s130 = smul.u32 4, %s15
        %p131 = scmp.lt.s32.totalorder %s130, 7
        %s132 = scalar_select %p131, %s130, 7
        %s133 = smul.addr %s132, 3
        %s134 = smul.addr %s133, 8
        %s135 = scalar_lea.vmem %s1, %s134
        %s136 = smul.u32 4, %s15
        %s137 = smul.u32 4, %s15
        %p138 = scmp.lt.s32.totalorder %s137, 7
        %s139 = scalar_select %p138, %s137, 7
        %s140 = smul.addr %s139, 3
        %s141 = smul.addr %s140, 8
        %s142 = scalar_lea.vmem %s1, %s141
        %s143 = smul.u32 4, %s15
        %vm144 = vcmask 139264
        %145 = vst.msk [vmem:[%s142] sm:$0x1] %vm144, 0.0
        %146 = vst.msk [vmem:[%s142 + $0x18] sm:$0x1] %vm144, 0.0
        %147 = vst.msk [vmem:[%s142 + $0x30] sm:$0x1] %vm144, 0.0
        %148 = vst.msk [vmem:[%s142 + $0x48] sm:$0x1] %vm144, 0.0
        %149 = vst.msk [vmem:[%s142 + $0x11] sm:$0x1] %vm144, 0.0
        %150 = vst.msk [vmem:[%s142 + $0x29] sm:$0x1] %vm144, 0.0
        %151 = vst.msk [vmem:[%s142 + $0x41] sm:$0x1] %vm144, 0.0
        %152 = vst.msk [vmem:[%s142 + $0x59] sm:$0x1] %vm144, 0.0
        %vm153 = vcmask 7168
        %154 = vst.msk [vmem:[%s142 + $0x1] sm:$0xff] %vm153, 0.0
        %155 = vst.msk [vmem:[%s142 + $0x9] sm:$0xff] %vm153, 0.0
        %156 = vst.msk [vmem:[%s142 + $0x19] sm:$0xff] %vm153, 0.0
        %157 = vst.msk [vmem:[%s142 + $0x21] sm:$0xff] %vm153, 0.0
        %158 = vst.msk [vmem:[%s142 + $0x31] sm:$0xff] %vm153, 0.0
        %159 = vst.msk [vmem:[%s142 + $0x39] sm:$0xff] %vm153, 0.0
        %160 = vst.msk [vmem:[%s142 + $0x49] sm:$0xff] %vm153, 0.0
        %161 = vst.msk [vmem:[%s142 + $0x51] sm:$0xff] %vm153, 0.0
        %vm162 = vcmask 146568
        %163 = vst.msk [vmem:[%s142 + $0x1] sm:$0xff] %vm162, 0.0
        %164 = vst.msk [vmem:[%s142 + $0x9] sm:$0xff] %vm162, 0.0
        %165 = vst.msk [vmem:[%s142 + $0x19] sm:$0xff] %vm162, 0.0
        %166 = vst.msk [vmem:[%s142 + $0x21] sm:$0xff] %vm162, 0.0
        %167 = vst.msk [vmem:[%s142 + $0x31] sm:$0xff] %vm162, 0.0
        %168 = vst.msk [vmem:[%s142 + $0x39] sm:$0xff] %vm162, 0.0
        %169 = vst.msk [vmem:[%s142 + $0x49] sm:$0xff] %vm162, 0.0
        %170 = vst.msk [vmem:[%s142 + $0x51] sm:$0xff] %vm162, 0.0
        %v171 = vld [vmem:[%s115] sm:$0xff]
        %v172 = vld [vmem:[%s115 + $0x8] sm:$0xff]
        %v173 = vld [vmem:[%s115 + $0x10] sm:$0xff]
        %v174 = vld [vmem:[%s115 + $0x18] sm:$0xff]
        %v175 = vld [vmem:[%s115 + $0x20] sm:$0xff]
        %v176 = vld [vmem:[%s115 + $0x28] sm:$0xff]
        %v177 = vld [vmem:[%s115 + $0x30] sm:$0xff]
        %v178 = vld [vmem:[%s115 + $0x38] sm:$0xff]
        %187 = vrot.lane.b32.xlu0 %v171, 1
        %v188 = vpop.permute.xlu0 %187
        %189 = vrot.lane.b32.xlu0 %v172, 1
        %v190 = vpop.permute.xlu0 %189
        %191 = vrot.lane.b32.xlu0 %v173, 1
        %v192 = vpop.permute.xlu0 %191
        %193 = vrot.lane.b32.xlu0 %v174, 1
        %v194 = vpop.permute.xlu0 %193
        %195 = vrot.lane.b32.xlu0 %v175, 1
        %v196 = vpop.permute.xlu0 %195
        %197 = vrot.lane.b32.xlu0 %v176, 1
        %v198 = vpop.permute.xlu0 %197
        %199 = vrot.lane.b32.xlu0 %v177, 1
        %v200 = vpop.permute.xlu0 %199
        %201 = vrot.lane.b32.xlu0 %v178, 1
        %v202 = vpop.permute.xlu0 %201
        %vm211 = vcmask 138248
        %212 = vst.msk [vmem:[%s142 + $0x1] sm:$0xff] %vm211, %v188
        %213 = vst.msk [vmem:[%s142 + $0x9] sm:$0xff] %vm211, %v190
        %214 = vst.msk [vmem:[%s142 + $0x19] sm:$0xff] %vm211, %v192
        %215 = vst.msk [vmem:[%s142 + $0x21] sm:$0xff] %vm211, %v194
        %216 = vst.msk [vmem:[%s142 + $0x31] sm:$0xff] %vm211, %v196
        %217 = vst.msk [vmem:[%s142 + $0x39] sm:$0xff] %vm211, %v198
        %218 = vst.msk [vmem:[%s142 + $0x49] sm:$0xff] %vm211, %v200
        %219 = vst.msk [vmem:[%s142 + $0x51] sm:$0xff] %vm211, %v202
        %s220 = smul.u32 4, %s15
        %p221 = scmp.lt.s32.totalorder %s220, 7
        %s222 = scalar_select %p221, %s220, 7
        %s223 = smul.addr %s222, 3
        %s224 = smul.addr %s223, 8
        %s225 = scalar_lea.vmem %s1, %s224
        // Predicated region
        $region29: #{tpu_custom_call.1} parent=23 // pred_check
          %p226 = pneg %p59
        $region30: #{tpu_custom_call.1} parent=23 // pred_check_branch
          %228 = sbr.rel (%p226) target = $region32
        $region31: #{tpu_custom_call.1} parent=23 // pred_region
          %s229 = smul.u32 4, %s15
        $region32: #{tpu_custom_call.1} parent=23 // pred_fallthru
          _
      $region24: #{tpu_custom_call.1} parent=5 // pred_fallthru
        _
      %p230 = scmp.le.s32.totalorder 2, %s10
      // Predicated region
      $region33: #{tpu_custom_call.1} parent=5 // pred_check
        %p231 = pneg %p230
      $region34: #{tpu_custom_call.1} parent=5 // pred_check_branch
        %233 = sbr.rel (%p231) target = $region36
      $region35: #{tpu_custom_call.1} parent=5 // pred_region
        %s234 = ssub.s32 %s10, 2
        // Predicated region
        $region37: #{tpu_custom_call.1} parent=35 // pred_check
          %p235 = pneg %p65
        $region38: #{tpu_custom_call.1} parent=35 // pred_check_branch
          %237 = sbr.rel (%p235) target = $region40
        $region39: #{tpu_custom_call.1} parent=35 // pred_region
          %s238 = smul.u32 4, %s16
          %p239 = scmp.lt.s32.totalorder %s238, 7
          %s240 = scalar_select %p239, %s238, 7
          %s241 = smul.addr %s240, 3
          %s242 = smul.addr %s241, 8
          %s243 = scalar_lea.vmem %s1, %s242
        $region40: #{tpu_custom_call.1} parent=35 // pred_fallthru
          _
      $region36: #{tpu_custom_call.1} parent=5 // pred_fallthru
        _
    $region6: #{tpu_custom_call.1} parent=1 // loop_footer
      %s14 = sadd.s32 1, %s10
    $region7: #{tpu_custom_call.1} parent=1 // loop_footer_branch
      %9 = sbr.rel target = $region3
    $region8: #{tpu_custom_call.1} parent=1 // loop_exit
      _
    %244 = vsyncpa [#allocation3], 1
    %s245 = scalar_lea.sflag [#allocation3], 1
    %246 = vsyncpa %s245, 1

</llo_original>
